<compile_context>
chip_gen: v5e
topology: v5e:2x2
jax: 0.10.0
libtpu: 0.0.40
codegen_flags: <defaults>
</compile_context>

<pallas_src>
import functools
import math

import jax
import jax.numpy as jnp
from jax.experimental import pallas as pl
from jax.experimental.pallas import tpu as pltpu


def _cdiv(a, b):
    return -(-a // b)


# ---------------------------------------------------------------------------
# In-kernel helper: segmented window sums via roll-and-add trees
# ---------------------------------------------------------------------------
def _window_sum(a, L, *, backward):
    """res[i] = sum_{j<L} a[..., i+j] (backward=True) or a[..., i-j] (False).

    O(log L) XLU rolls + VPU adds over the lane axis (cyclic).  Works for any
    L via the binary decomposition of the window length.  Only non-negative
    shifts are used (pltpu.roll requirement).
    """
    n = a.shape[-1]

    def rot(v, m):
        m = m % n
        if m == 0:
            return v
        return pltpu.roll(v, (n - m) if backward else m, axis=1)

    res = None
    s = a              # running window sums of length `length`
    length = 1
    covered = 0
    rem = L
    while rem:
        if rem & 1:
            term = rot(s, covered)
            res = term if res is None else res + term
            covered += length
        rem >>= 1
        if rem:
            s = s + rot(s, length)
            length *= 2
    return res


# ---------------------------------------------------------------------------
# Pallas kernel: one batch-block (bt samples, lane-concatenated) per grid step
# ---------------------------------------------------------------------------
def se_basic_block_kernel(x_ref, w1_ref, b1_ref, w2_ref, b2_ref,
                          wfc1_ref, wfc2_ref, o_ref, *, L):
    x_bf = x_ref[...]                                    # (C, n) bf16
    C, n = x_bf.shape
    x_f32 = x_bf.astype(jnp.float32)

    # Per-sample boundary masks: zero conv taps that would wrap across
    # neighbouring samples (padding=1 semantics).
    col = jax.lax.broadcasted_iota(jnp.int32, (C, n), 1) % L
    has_left = col != 0
    has_right = col != (L - 1)

    def conv_bn(inp_f32, inp_bf, w_ref, b_ref):
        # 3-tap conv as three accumulated (C,C)@(C,n) MXU matmuls; shifted
        # taps via XLU roll (in f32, then cast to bf16 for the MXU).
        x_m1 = jnp.where(has_left, pltpu.roll(inp_f32, 1, axis=1), 0.0)      # x[l-1]
        x_p1 = jnp.where(has_right, pltpu.roll(inp_f32, n - 1, axis=1), 0.0)  # x[l+1]
        acc = jnp.dot(w_ref[1], inp_bf, preferred_element_type=jnp.float32)
        acc = acc + jnp.dot(w_ref[0], x_m1.astype(jnp.bfloat16),
                            preferred_element_type=jnp.float32)
        acc = acc + jnp.dot(w_ref[2], x_p1.astype(jnp.bfloat16),
                            preferred_element_type=jnp.float32)
        return acc + b_ref[...]                          # BN bias (scale folded)

    # conv1 -> bn1 -> relu
    h1 = jnp.maximum(conv_bn(x_f32, x_bf, w1_ref, b1_ref), 0.0)      # (C, n) f32
    # conv2 -> bn2
    out = conv_bn(h1, h1.astype(jnp.bfloat16), w2_ref, b2_ref)        # (C, n) f32

    # SE: per-sample mean -> fc1 -> relu -> fc2 -> sigmoid.  fc1 commutes with
    # the mean, so apply it first: the segmented mean/broadcast trees then run
    # on the tiny (H, n) tensor instead of (C, n).
    t = jnp.dot(wfc1_ref[...], out.astype(jnp.bfloat16),
                preferred_element_type=jnp.float32)                   # (H, n)
    tw = _window_sum(t, L, backward=True)                             # len-L window sums
    col_h = jax.lax.broadcasted_iota(jnp.int32, t.shape, 1) % L
    tm = jnp.where(col_h == 0, tw, 0.0) * (1.0 / L)                   # per-sample means
    y = _window_sum(tm, L, backward=False)                            # broadcast in-sample
    z = jnp.maximum(y, 0.0)                                           # (H, n)
    s_full = jax.nn.sigmoid(
        jnp.dot(wfc2_ref[...], z.astype(jnp.bfloat16),
                preferred_element_type=jnp.float32))                  # (C, n)

    # scale, residual add (downsample=None), relu
    o_ref[...] = jnp.maximum(out * s_full + x_f32, 0.0).astype(o_ref.dtype)


# ---------------------------------------------------------------------------
# Tiling heuristic
# ---------------------------------------------------------------------------
def _choose_tiling(B, C, L):
    """Largest batch block bt per grid step such that (a) bt*L % 128 == 0
    (lane-dense stores), (b) the per-step working set fits a conservative,
    v7x-safe VMEM budget, (c) >= 2 grid steps whenever the batch allows it
    (keeps both v7x TensorCores busy via the 'parallel' grid axis)."""
    g = 128 // math.gcd(L, 128)                     # bt granularity for (a)
    # (b): ~80 B/elem covers bf16 double-buffered input, f32 double-buffered
    # output and live f32 intermediates; also keep the tile <= ~8K lanes.
    budget_lanes = (24 << 20) // max(1, 48 * C)
    n_cap = max(g * L, min(8192, budget_lanes))
    # TODO(synk): a single sample longer than the lane budget would need an
    # additional inner L tiling; not required for these shapes.
    bt = max(g, ((n_cap // L) // g) * g)
    bt = min(bt, _cdiv(B, g) * g)                   # don't exceed (padded) batch
    grid = _cdiv(B, bt)
    if grid < 2 and bt > g:                         # (c)
        bt = max(g, _cdiv(_cdiv(B, 2), g) * g)
        grid = _cdiv(B, bt)
    return bt, grid


# ---------------------------------------------------------------------------
# Wrapper
# ---------------------------------------------------------------------------
def se_basic_block(x, conv_w1, bn1, conv_w2, bn2, wfc1, wfc2, eps=1e-5):
    """x: (B, C, L).  conv_w*: (C, C, 3) PyTorch layout.  bn*: (gamma, beta,
    running_mean, running_var).  wfc1: (C//r, C), wfc2: (C, C//r)."""
    B, C, L = x.shape
    H = wfc1.shape[0]
    out_dtype = x.dtype

    # Fold BN (inference mode) into per-tap conv weights + per-channel bias.
    def fold(conv_w, bn):
        g_, be, m, v = bn
        s = g_ / jnp.sqrt(v + eps)                        # (C,)
        w = conv_w * s[:, None, None]                     # scale output channel
        w_taps = jnp.transpose(w, (2, 0, 1))              # (3, Co, Ci): left/mid/right
        b = (be - m * s).reshape(C, 1).astype(jnp.float32)
        return w_taps.astype(jnp.bfloat16), b

    w1, b1 = fold(conv_w1, bn1)
    w2, b2 = fold(conv_w2, bn2)
    wfc1_bf = wfc1.astype(jnp.bfloat16)
    wfc2_bf = wfc2.astype(jnp.bfloat16)

    bt, grid = _choose_tiling(B, C, L)
    n = bt * L
    B_pad = bt * grid

    xp = x if B_pad == B else jnp.pad(x, ((0, B_pad - B), (0, 0), (0, 0)))
    # Lane-concatenate the batch: (B_pad, C, L) -> (C, B_pad*L), streamed bf16.
    x_cat = jnp.transpose(xp, (1, 0, 2)).reshape(C, B_pad * L).astype(jnp.bfloat16)

    def const_spec(shape):
        return pl.BlockSpec(shape, lambda i: (0,) * len(shape))

    # Per-step working-set estimate -> scoped VMEM limit (capped v7x-safe).
    per_step = 80 * C * n
    const_bytes = 4 * (2 * 3 * C * C * 2 + 2 * C * 4 + (H * C + C * H) * 2)
    vmem_limit = int(min(44 << 20, max(16 << 20, per_step + const_bytes + (1 << 20))))

    out_cat = pl.pallas_call(
        functools.partial(se_basic_block_kernel, L=L),
        out_shape=jax.ShapeDtypeStruct((C, B_pad * L), out_dtype),
        grid_spec=pltpu.PrefetchScalarGridSpec(
            num_scalar_prefetch=0,
            grid=(grid,),
            in_specs=[
                pl.BlockSpec((C, n), lambda i: (0, i)),    # x (batch-block cols)
                const_spec((3, C, C)),                     # conv1 taps (BN folded)
                const_spec((C, 1)),                        # bn1 bias
                const_spec((3, C, C)),                     # conv2 taps (BN folded)
                const_spec((C, 1)),                        # bn2 bias
                const_spec((H, C)),                        # SE fc1
                const_spec((C, H)),                        # SE fc2
            ],
            out_specs=pl.BlockSpec((C, n), lambda i: (0, i)),
        ),
        compiler_params=pltpu.CompilerParams(
            dimension_semantics=("parallel",),
            vmem_limit_bytes=vmem_limit),
    )(x_cat, w1, b1, w2, b2, wfc1_bf, wfc2_bf)

    out = jnp.transpose(out_cat.reshape(C, B_pad, L), (1, 0, 2))
    return out[:B]


# ---------------------------------------------------------------------------
# Pure-JAX f32 reference (same semantics, used for a sanity check)
# ---------------------------------------------------------------------------
def ref_forward(x, cw1, g1, be1, m1, v1, cw2, g2, be2, m2, v2, wfc1, wfc2,
                eps=1e-5):
    def conv(inp, w):  # inp (B,Ci,L), w (Co,Ci,3)
        return jax.lax.conv_general_dilated(
            inp, w, window_strides=(1,), padding=((1, 1),),
            dimension_numbers=("NCH", "OIH", "NCH"))

    def bn(o, g, be, m, v):
        return (o - m[None, :, None]) / jnp.sqrt(v[None, :, None] + eps) \
               * g[None, :, None] + be[None, :, None]

    out = jnp.maximum(bn(conv(x, cw1), g1, be1, m1, v1), 0.0)
    out = bn(conv(out, cw2), g2, be2, m2, v2)
    y = jnp.mean(out, axis=2)                      # (B, C)
    z = jnp.maximum(y @ wfc1.T, 0.0)               # (B, H)
    s = jax.nn.sigmoid(z @ wfc2.T)                 # (B, C)
    out = out * s[:, :, None]
    return jnp.maximum(out + x, 0.0)


if __name__ == "__main__":
    B, C, L = 8, 32, 16          # inplanes == planes == 32, stride=1
    reduction = 16
    H = C // reduction           # SE hidden dim = 2
    eps = 1e-5

    key = jax.random.PRNGKey(0)
    ks = jax.random.split(key, 12)

    x = jax.random.normal(ks[0], (B, C, L), jnp.float32)

    # Conv weights in PyTorch layout (Co, Ci, K=3)
    cw1 = jax.random.normal(ks[1], (C, C, 3), jnp.float32) * 0.1
    cw2 = jax.random.normal(ks[2], (C, C, 3), jnp.float32) * 0.1

    # BatchNorm params (inference mode)
    g1 = 1.0 + 0.1 * jax.random.normal(ks[3], (C,), jnp.float32)
    be1 = 0.1 * jax.random.normal(ks[4], (C,), jnp.float32)
    m1 = 0.1 * jax.random.normal(ks[5], (C,), jnp.float32)
    v1 = jnp.abs(jax.random.normal(ks[6], (C,), jnp.float32)) + 0.5
    g2 = 1.0 + 0.1 * jax.random.normal(ks[7], (C,), jnp.float32)
    be2 = 0.1 * jax.random.normal(ks[8], (C,), jnp.float32)
    m2 = 0.1 * jax.random.normal(ks[9], (C,), jnp.float32)
    v2 = jnp.abs(jax.random.normal(ks[10], (C,), jnp.float32)) + 0.5

    # SE fc weights (Linear, bias=False): fc1 (H, C), fc2 (C, H)
    kfc1, kfc2 = jax.random.split(ks[11])
    wfc1 = jax.random.normal(kfc1, (H, C), jnp.float32) * 0.2
    wfc2 = jax.random.normal(kfc2, (C, H), jnp.float32) * 0.2

    out = se_basic_block(x, cw1, (g1, be1, m1, v1),
                         cw2, (g2, be2, m2, v2), wfc1, wfc2, eps=eps)
    out = jax.block_until_ready(out)

    ref = ref_forward(x, cw1, g1, be1, m1, v1, cw2, g2, be2, m2, v2,
                      wfc1, wfc2, eps)
    assert out.shape == (B, C, L)
    # Kernel streams/accumulates in bf16/f32 -> compare with bf16-level tolerance.
    assert jnp.allclose(out, ref, rtol=5e-2, atol=5e-2), \
        f"max abs err = {jnp.max(jnp.abs(out - ref))}"

    print("KERNEL_OK")
</pallas_src>

<mosaic_0001>
module attributes {stable_mosaic.version = 11 : i64} {
  func.func @se_basic_block_kernel(%arg0: i32, %arg1: memref<32x128xbf16, #tpu.memory_space<vmem>>, %arg2: memref<3x32x32xbf16, #tpu.memory_space<vmem>>, %arg3: memref<32x1xf32, #tpu.memory_space<vmem>>, %arg4: memref<3x32x32xbf16, #tpu.memory_space<vmem>>, %arg5: memref<32x1xf32, #tpu.memory_space<vmem>>, %arg6: memref<2x32xbf16, #tpu.memory_space<vmem>>, %arg7: memref<32x2xbf16, #tpu.memory_space<vmem>>, %arg8: memref<32x128xf32, #tpu.memory_space<vmem>>) attributes {dimension_semantics = [#tpu.dimension_semantics<parallel>], iteration_bounds = array<i64: 1>, scalar_prefetch = 0 : i64, scratch_operands = 0 : i64, tpu.core_type = #tpu.core_type<tc>, window_params = [{transform_indices = @transform_0, window_bounds = array<i64: 32, 128>}, {pipeline_mode = #tpu.pipeline_mode<synchronous>, transform_indices = @transform_1, window_bounds = array<i64: 3, 32, 32>}, {pipeline_mode = #tpu.pipeline_mode<synchronous>, transform_indices = @transform_2, window_bounds = array<i64: 32, 1>}, {pipeline_mode = #tpu.pipeline_mode<synchronous>, transform_indices = @transform_3, window_bounds = array<i64: 3, 32, 32>}, {pipeline_mode = #tpu.pipeline_mode<synchronous>, transform_indices = @transform_4, window_bounds = array<i64: 32, 1>}, {pipeline_mode = #tpu.pipeline_mode<synchronous>, transform_indices = @transform_5, window_bounds = array<i64: 2, 32>}, {pipeline_mode = #tpu.pipeline_mode<synchronous>, transform_indices = @transform_6, window_bounds = array<i64: 32, 2>}, {transform_indices = @transform_7, window_bounds = array<i64: 32, 128>}]} {
    %c0 = arith.constant 0 : index
    %c0_0 = arith.constant 0 : index
    %0 = vector.load %arg1[%c0, %c0_0] : memref<32x128xbf16, #tpu.memory_space<vmem>>, vector<32x128xbf16>
    %1 = arith.extf %0 : vector<32x128xbf16> to vector<32x128xf32>
    %2 = tpu.iota {dimensions = array<i32: 1>} : vector<32x128xi32>
    %c16_i32 = arith.constant 16 : i32
    %c0_i32 = arith.constant 0 : i32
    %3 = arith.cmpi eq, %c16_i32, %c0_i32 : i32
    %c1_i32 = arith.constant 1 : i32
    %4 = arith.select %3, %c1_i32, %c16_i32 : i32
    %5 = vector.broadcast %4 : i32 to vector<32x128xi32>
    %6 = arith.remsi %2, %5 : vector<32x128xi32>
    %c0_i32_1 = arith.constant 0 : i32
    %7 = vector.broadcast %c0_i32_1 : i32 to vector<32x128xi32>
    %8 = arith.cmpi ne, %6, %7 : vector<32x128xi32>
    %c0_i32_2 = arith.constant 0 : i32
    %9 = vector.broadcast %c0_i32_2 : i32 to vector<32x128xi32>
    %10 = arith.cmpi slt, %6, %9 : vector<32x128xi32>
    %c0_i32_3 = arith.constant 0 : i32
    %11 = arith.cmpi slt, %4, %c0_i32_3 : i32
    %12 = vector.broadcast %11 : i1 to vector<32x128xi1>
    %13 = vector.broadcast %12 : vector<32x128xi1> to vector<32x128xi1>
    %14 = arith.xori %10, %13 : vector<32x128xi1>
    %15 = arith.andi %14, %8 : vector<32x128xi1>
    %16 = vector.broadcast %4 : i32 to vector<32x128xi32>
    %17 = arith.addi %6, %16 : vector<32x128xi32>
    %18 = arith.select %15, %17, %6 : vector<32x128xi1>, vector<32x128xi32>
    %c0_i32_4 = arith.constant 0 : i32
    %19 = vector.broadcast %c0_i32_4 : i32 to vector<32x128xi32>
    %20 = arith.cmpi ne, %18, %19 : vector<32x128xi32>
    %c15_i32 = arith.constant 15 : i32
    %21 = vector.broadcast %c15_i32 : i32 to vector<32x128xi32>
    %22 = arith.cmpi ne, %18, %21 : vector<32x128xi32>
    %c1_i32_5 = arith.constant 1 : i32
    %23 = tpu.dynamic_rotate %1 by %c1_i32_5 dim 1 : vector<32x128xf32>, i32 -> vector<32x128xf32>
    %cst = arith.constant 0.000000e+00 : f32
    %24 = vector.broadcast %cst : f32 to vector<32x128xf32>
    %25 = arith.select %20, %23, %24 : vector<32x128xi1>, vector<32x128xf32>
    %c127_i32 = arith.constant 127 : i32
    %26 = tpu.dynamic_rotate %1 by %c127_i32 dim 1 : vector<32x128xf32>, i32 -> vector<32x128xf32>
    %cst_6 = arith.constant 0.000000e+00 : f32
    %27 = vector.broadcast %cst_6 : f32 to vector<32x128xf32>
    %28 = arith.select %22, %26, %27 : vector<32x128xi1>, vector<32x128xf32>
    %c1 = arith.constant 1 : index
    %c0_7 = arith.constant 0 : index
    %c0_8 = arith.constant 0 : index
    %29 = vector.load %arg2[%c1, %c0_7, %c0_8] : memref<3x32x32xbf16, #tpu.memory_space<vmem>>, vector<1x32x32xbf16>
    %30 = vector.shape_cast %29 : vector<1x32x32xbf16> to vector<32x32xbf16>
    %cst_9 = arith.constant dense<0.000000e+00> : vector<32x128xf32>
    %31 = tpu.matmul %30, %0, %cst_9 {dimension_numbers = #tpu.dot_dimension_numbers<[1], [0], [0], [1], [0, 0, 1, 1], [], []>} : vector<32x32xbf16>, vector<32x128xbf16>, vector<32x128xf32> -> vector<32x128xf32>
    %c0_10 = arith.constant 0 : index
    %c0_11 = arith.constant 0 : index
    %c0_12 = arith.constant 0 : index
    %32 = vector.load %arg2[%c0_10, %c0_11, %c0_12] : memref<3x32x32xbf16, #tpu.memory_space<vmem>>, vector<1x32x32xbf16>
    %33 = vector.shape_cast %32 : vector<1x32x32xbf16> to vector<32x32xbf16>
    %34 = arith.truncf %25 : vector<32x128xf32> to vector<32x128xbf16>
    %cst_13 = arith.constant dense<0.000000e+00> : vector<32x128xf32>
    %35 = tpu.matmul %33, %34, %cst_13 {dimension_numbers = #tpu.dot_dimension_numbers<[1], [0], [0], [1], [0, 0, 1, 1], [], []>} : vector<32x32xbf16>, vector<32x128xbf16>, vector<32x128xf32> -> vector<32x128xf32>
    %36 = arith.addf %31, %35 : vector<32x128xf32>
    %c2 = arith.constant 2 : index
    %c0_14 = arith.constant 0 : index
    %c0_15 = arith.constant 0 : index
    %37 = vector.load %arg2[%c2, %c0_14, %c0_15] : memref<3x32x32xbf16, #tpu.memory_space<vmem>>, vector<1x32x32xbf16>
    %38 = vector.shape_cast %37 : vector<1x32x32xbf16> to vector<32x32xbf16>
    %39 = arith.truncf %28 : vector<32x128xf32> to vector<32x128xbf16>
    %cst_16 = arith.constant dense<0.000000e+00> : vector<32x128xf32>
    %40 = tpu.matmul %38, %39, %cst_16 {dimension_numbers = #tpu.dot_dimension_numbers<[1], [0], [0], [1], [0, 0, 1, 1], [], []>} : vector<32x32xbf16>, vector<32x128xbf16>, vector<32x128xf32> -> vector<32x128xf32>
    %41 = arith.addf %36, %40 : vector<32x128xf32>
    %c0_17 = arith.constant 0 : index
    %c0_18 = arith.constant 0 : index
    %42 = vector.load %arg3[%c0_17, %c0_18] : memref<32x1xf32, #tpu.memory_space<vmem>>, vector<32x1xf32>
    %43 = vector.broadcast %42 : vector<32x1xf32> to vector<32x128xf32>
    %44 = arith.addf %41, %43 : vector<32x128xf32>
    %cst_19 = arith.constant 0.000000e+00 : f32
    %45 = vector.broadcast %cst_19 : f32 to vector<32x128xf32>
    %46 = arith.maximumf %44, %45 : vector<32x128xf32>
    %47 = arith.truncf %46 : vector<32x128xf32> to vector<32x128xbf16>
    %c1_i32_20 = arith.constant 1 : i32
    %48 = tpu.dynamic_rotate %46 by %c1_i32_20 dim 1 : vector<32x128xf32>, i32 -> vector<32x128xf32>
    %cst_21 = arith.constant 0.000000e+00 : f32
    %49 = vector.broadcast %cst_21 : f32 to vector<32x128xf32>
    %50 = arith.select %20, %48, %49 : vector<32x128xi1>, vector<32x128xf32>
    %c127_i32_22 = arith.constant 127 : i32
    %51 = tpu.dynamic_rotate %46 by %c127_i32_22 dim 1 : vector<32x128xf32>, i32 -> vector<32x128xf32>
    %cst_23 = arith.constant 0.000000e+00 : f32
    %52 = vector.broadcast %cst_23 : f32 to vector<32x128xf32>
    %53 = arith.select %22, %51, %52 : vector<32x128xi1>, vector<32x128xf32>
    %c1_24 = arith.constant 1 : index
    %c0_25 = arith.constant 0 : index
    %c0_26 = arith.constant 0 : index
    %54 = vector.load %arg4[%c1_24, %c0_25, %c0_26] : memref<3x32x32xbf16, #tpu.memory_space<vmem>>, vector<1x32x32xbf16>
    %55 = vector.shape_cast %54 : vector<1x32x32xbf16> to vector<32x32xbf16>
    %cst_27 = arith.constant dense<0.000000e+00> : vector<32x128xf32>
    %56 = tpu.matmul %55, %47, %cst_27 {dimension_numbers = #tpu.dot_dimension_numbers<[1], [0], [0], [1], [0, 0, 1, 1], [], []>} : vector<32x32xbf16>, vector<32x128xbf16>, vector<32x128xf32> -> vector<32x128xf32>
    %c0_28 = arith.constant 0 : index
    %c0_29 = arith.constant 0 : index
    %c0_30 = arith.constant 0 : index
    %57 = vector.load %arg4[%c0_28, %c0_29, %c0_30] : memref<3x32x32xbf16, #tpu.memory_space<vmem>>, vector<1x32x32xbf16>
    %58 = vector.shape_cast %57 : vector<1x32x32xbf16> to vector<32x32xbf16>
    %59 = arith.truncf %50 : vector<32x128xf32> to vector<32x128xbf16>
    %cst_31 = arith.constant dense<0.000000e+00> : vector<32x128xf32>
    %60 = tpu.matmul %58, %59, %cst_31 {dimension_numbers = #tpu.dot_dimension_numbers<[1], [0], [0], [1], [0, 0, 1, 1], [], []>} : vector<32x32xbf16>, vector<32x128xbf16>, vector<32x128xf32> -> vector<32x128xf32>
    %61 = arith.addf %56, %60 : vector<32x128xf32>
    %c2_32 = arith.constant 2 : index
    %c0_33 = arith.constant 0 : index
    %c0_34 = arith.constant 0 : index
    %62 = vector.load %arg4[%c2_32, %c0_33, %c0_34] : memref<3x32x32xbf16, #tpu.memory_space<vmem>>, vector<1x32x32xbf16>
    %63 = vector.shape_cast %62 : vector<1x32x32xbf16> to vector<32x32xbf16>
    %64 = arith.truncf %53 : vector<32x128xf32> to vector<32x128xbf16>
    %cst_35 = arith.constant dense<0.000000e+00> : vector<32x128xf32>
    %65 = tpu.matmul %63, %64, %cst_35 {dimension_numbers = #tpu.dot_dimension_numbers<[1], [0], [0], [1], [0, 0, 1, 1], [], []>} : vector<32x32xbf16>, vector<32x128xbf16>, vector<32x128xf32> -> vector<32x128xf32>
    %66 = arith.addf %61, %65 : vector<32x128xf32>
    %c0_36 = arith.constant 0 : index
    %c0_37 = arith.constant 0 : index
    %67 = vector.load %arg5[%c0_36, %c0_37] : memref<32x1xf32, #tpu.memory_space<vmem>>, vector<32x1xf32>
    %68 = vector.broadcast %67 : vector<32x1xf32> to vector<32x128xf32>
    %69 = arith.addf %66, %68 : vector<32x128xf32>
    %c0_38 = arith.constant 0 : index
    %c0_39 = arith.constant 0 : index
    %70 = vector.load %arg6[%c0_38, %c0_39] : memref<2x32xbf16, #tpu.memory_space<vmem>>, vector<2x32xbf16>
    %71 = arith.truncf %69 : vector<32x128xf32> to vector<32x128xbf16>
    %cst_40 = arith.constant dense<0.000000e+00> : vector<2x128xf32>
    %72 = tpu.matmul %70, %71, %cst_40 {dimension_numbers = #tpu.dot_dimension_numbers<[1], [0], [0], [1], [0, 0, 1, 1], [], []>} : vector<2x32xbf16>, vector<32x128xbf16>, vector<2x128xf32> -> vector<2x128xf32>
    %c127_i32_41 = arith.constant 127 : i32
    %73 = tpu.dynamic_rotate %72 by %c127_i32_41 dim 1 : vector<2x128xf32>, i32 -> vector<2x128xf32>
    %74 = arith.addf %72, %73 : vector<2x128xf32>
    %c126_i32 = arith.constant 126 : i32
    %75 = tpu.dynamic_rotate %74 by %c126_i32 dim 1 : vector<2x128xf32>, i32 -> vector<2x128xf32>
    %76 = arith.addf %74, %75 : vector<2x128xf32>
    %c124_i32 = arith.constant 124 : i32
    %77 = tpu.dynamic_rotate %76 by %c124_i32 dim 1 : vector<2x128xf32>, i32 -> vector<2x128xf32>
    %78 = arith.addf %76, %77 : vector<2x128xf32>
    %c120_i32 = arith.constant 120 : i32
    %79 = tpu.dynamic_rotate %78 by %c120_i32 dim 1 : vector<2x128xf32>, i32 -> vector<2x128xf32>
    %80 = arith.addf %78, %79 : vector<2x128xf32>
    %81 = tpu.iota {dimensions = array<i32: 1>} : vector<2x128xi32>
    %c16_i32_42 = arith.constant 16 : i32
    %c0_i32_43 = arith.constant 0 : i32
    %82 = arith.cmpi eq, %c16_i32_42, %c0_i32_43 : i32
    %c1_i32_44 = arith.constant 1 : i32
    %83 = arith.select %82, %c1_i32_44, %c16_i32_42 : i32
    %84 = vector.broadcast %83 : i32 to vector<2x128xi32>
    %85 = arith.remsi %81, %84 : vector<2x128xi32>
    %c0_i32_45 = arith.constant 0 : i32
    %86 = vector.broadcast %c0_i32_45 : i32 to vector<2x128xi32>
    %87 = arith.cmpi ne, %85, %86 : vector<2x128xi32>
    %c0_i32_46 = arith.constant 0 : i32
    %88 = vector.broadcast %c0_i32_46 : i32 to vector<2x128xi32>
    %89 = arith.cmpi slt, %85, %88 : vector<2x128xi32>
    %c0_i32_47 = arith.constant 0 : i32
    %90 = arith.cmpi slt, %83, %c0_i32_47 : i32
    %91 = vector.broadcast %90 : i1 to vector<2x128xi1>
    %92 = vector.broadcast %91 : vector<2x128xi1> to vector<2x128xi1>
    %93 = arith.xori %89, %92 : vector<2x128xi1>
    %94 = arith.andi %93, %87 : vector<2x128xi1>
    %95 = vector.broadcast %83 : i32 to vector<2x128xi32>
    %96 = arith.addi %85, %95 : vector<2x128xi32>
    %97 = arith.select %94, %96, %85 : vector<2x128xi1>, vector<2x128xi32>
    %c0_i32_48 = arith.constant 0 : i32
    %98 = vector.broadcast %c0_i32_48 : i32 to vector<2x128xi32>
    %99 = arith.cmpi eq, %97, %98 : vector<2x128xi32>
    %cst_49 = arith.constant 0.000000e+00 : f32
    %100 = vector.broadcast %cst_49 : f32 to vector<2x128xf32>
    %101 = arith.select %99, %80, %100 : vector<2x128xi1>, vector<2x128xf32>
    %cst_50 = arith.constant 6.250000e-02 : f32
    %102 = vector.broadcast %cst_50 : f32 to vector<2x128xf32>
    %103 = arith.mulf %101, %102 : vector<2x128xf32>
    %c1_i32_51 = arith.constant 1 : i32
    %104 = tpu.dynamic_rotate %103 by %c1_i32_51 dim 1 : vector<2x128xf32>, i32 -> vector<2x128xf32>
    %105 = arith.addf %103, %104 : vector<2x128xf32>
    %c2_i32 = arith.constant 2 : i32
    %106 = tpu.dynamic_rotate %105 by %c2_i32 dim 1 : vector<2x128xf32>, i32 -> vector<2x128xf32>
    %107 = arith.addf %105, %106 : vector<2x128xf32>
    %c4_i32 = arith.constant 4 : i32
    %108 = tpu.dynamic_rotate %107 by %c4_i32 dim 1 : vector<2x128xf32>, i32 -> vector<2x128xf32>
    %109 = arith.addf %107, %108 : vector<2x128xf32>
    %c8_i32 = arith.constant 8 : i32
    %110 = tpu.dynamic_rotate %109 by %c8_i32 dim 1 : vector<2x128xf32>, i32 -> vector<2x128xf32>
    %111 = arith.addf %109, %110 : vector<2x128xf32>
    %cst_52 = arith.constant 0.000000e+00 : f32
    %112 = vector.broadcast %cst_52 : f32 to vector<2x128xf32>
    %113 = arith.maximumf %111, %112 : vector<2x128xf32>
    %c0_53 = arith.constant 0 : index
    %c0_54 = arith.constant 0 : index
    %114 = vector.load %arg7[%c0_53, %c0_54] : memref<32x2xbf16, #tpu.memory_space<vmem>>, vector<32x2xbf16>
    %115 = arith.truncf %113 : vector<2x128xf32> to vector<2x128xbf16>
    %cst_55 = arith.constant dense<0.000000e+00> : vector<32x128xf32>
    %116 = tpu.matmul %114, %115, %cst_55 {dimension_numbers = #tpu.dot_dimension_numbers<[1], [0], [0], [1], [0, 0, 1, 1], [], []>} : vector<32x2xbf16>, vector<2x128xbf16>, vector<32x128xf32> -> vector<32x128xf32>
    %117 = arith.negf %116 : vector<32x128xf32>
    %118 = math.exp %117 : vector<32x128xf32>
    %cst_56 = arith.constant 1.000000e+00 : f32
    %119 = vector.broadcast %cst_56 : f32 to vector<32x128xf32>
    %120 = arith.addf %119, %118 : vector<32x128xf32>
    %121 = arith.divf %119, %120 : vector<32x128xf32>
    %122 = arith.mulf %69, %121 : vector<32x128xf32>
    %123 = arith.addf %122, %1 : vector<32x128xf32>
    %cst_57 = arith.constant 0.000000e+00 : f32
    %124 = vector.broadcast %cst_57 : f32 to vector<32x128xf32>
    %125 = arith.maximumf %123, %124 : vector<32x128xf32>
    %c0_58 = arith.constant 0 : index
    %c0_59 = arith.constant 0 : index
    %126 = vector.load %arg8[%c0_58, %c0_59] : memref<32x128xf32, #tpu.memory_space<vmem>>, vector<32x128xf32>
    tpu.vector_store %arg8[%c0_58, %c0_59], %125 {strides = array<i32>} : memref<32x128xf32, #tpu.memory_space<vmem>>, vector<32x128xf32>,
    return
  }
  func.func @transform_0(%arg0: i32) -> (i32, i32) {
    %c0_i32 = arith.constant 0 : i32
    %c0_i32_0 = arith.constant 0 : i32
    return %c0_i32, %arg0 : i32, i32
  }
  func.func @transform_1(%arg0: i32) -> (i32, i32, i32) {
    %c0_i32 = arith.constant 0 : i32
    %c0_i32_0 = arith.constant 0 : i32
    %c0_i32_1 = arith.constant 0 : i32
    %c0_i32_2 = arith.constant 0 : i32
    return %c0_i32, %c0_i32_0, %c0_i32_1 : i32, i32, i32
  }
  func.func @transform_2(%arg0: i32) -> (i32, i32) {
    %c0_i32 = arith.constant 0 : i32
    %c0_i32_0 = arith.constant 0 : i32
    %c0_i32_1 = arith.constant 0 : i32
    return %c0_i32, %c0_i32_0 : i32, i32
  }
  func.func @transform_3(%arg0: i32) -> (i32, i32, i32) {
    %c0_i32 = arith.constant 0 : i32
    %c0_i32_0 = arith.constant 0 : i32
    %c0_i32_1 = arith.constant 0 : i32
    %c0_i32_2 = arith.constant 0 : i32
    return %c0_i32, %c0_i32_0, %c0_i32_1 : i32, i32, i32
  }
  func.func @transform_4(%arg0: i32) -> (i32, i32) {
    %c0_i32 = arith.constant 0 : i32
    %c0_i32_0 = arith.constant 0 : i32
    %c0_i32_1 = arith.constant 0 : i32
    return %c0_i32, %c0_i32_0 : i32, i32
  }
  func.func @transform_5(%arg0: i32) -> (i32, i32) {
    %c0_i32 = arith.constant 0 : i32
    %c0_i32_0 = arith.constant 0 : i32
    %c0_i32_1 = arith.constant 0 : i32
    return %c0_i32, %c0_i32_0 : i32, i32
  }
  func.func @transform_6(%arg0: i32) -> (i32, i32) {
    %c0_i32 = arith.constant 0 : i32
    %c0_i32_0 = arith.constant 0 : i32
    %c0_i32_1 = arith.constant 0 : i32
    return %c0_i32, %c0_i32_0 : i32, i32
  }
  func.func @transform_7(%arg0: i32) -> (i32, i32) {
    %c0_i32 = arith.constant 0 : i32
    %c0_i32_0 = arith.constant 0 : i32
    return %c0_i32, %arg0 : i32, i32
  }
}

</mosaic_0001>

<llo_original>
// kernel: tpu_custom_call.1
$region0: #{tpu_custom_call.1}
  #allocation0 [shape = 'u32[]', space=smem, size = 0x4, offset = 0x4, fixed_abs, tag = 'smem constant byte address 0x4 - core index']
  #allocation1 [shape = 'u32[72,128]{1,0:T(1,128)}', space=vmem, size = 0x9000, scoped, tag = 'internal scratch']
  %s0 = inlined_call_operand.vmem [shape: bf16[32,128], index: 0, kind: input, shape index: {}]
  %s1 = inlined_call_operand.vmem [shape: bf16[3,32,32], index: 1, kind: input, shape index: {}]
  %s2 = inlined_call_operand.vmem [shape: f32[32,1], index: 2, kind: input, shape index: {}]
  %s3 = inlined_call_operand.hbm [shape: bf16[3,32,32], index: 3, kind: input, shape index: {}]
  %s4 = inlined_call_operand.vmem [shape: f32[32,1], index: 4, kind: input, shape index: {}]
  %s5 = inlined_call_operand.vmem [shape: bf16[2,32], index: 5, kind: input, shape index: {}]
  %s6 = inlined_call_operand.vmem [shape: bf16[32,2], index: 6, kind: input, shape index: {}]
  %s7 = inlined_call_operand.hbm [shape: f32[32,128], index: 7, kind: output, shape index: {}]
  %s8 = sld [smem:[#allocation0]]
  $region42: #{tpu_custom_call.1} parent=0
    _
  %s10 = ssub.s32 1, %s8
  %s11 = scalar_select 0, %s10, %s8
  $region1: #{tpu_custom_call.1} parent=0
    #allocation2 [shape = 'u8[24576]{0}', space=vmem, size = 0x6000, scoped, tag = 'input window, operand 3, single buffered']
    #allocation3 [shape = 's32[1]{0}', space=sflag, size = 0x4, scoped, tag = 'scoped memory for tpu_custom_call.1']
    #allocation4 [shape = 's32[1]{0}', space=sflag, size = 0x4, scoped, tag = 'scoped memory for tpu_custom_call.1']
    #allocation5 [shape = 'u8[16384]{0}', space=vmem, size = 0x4000, scoped, tag = 'output window, operand 0, single buffered']
    %12 = vsyncpa [#allocation3], 0
    %13 = vsyncpa [#allocation4], 0
    // Predicated region
    $region2: #{tpu_custom_call.1} parent=1 // pred_check
      _
    $region3: #{tpu_custom_call.1} parent=1 // pred_check_branch
      %15 = sbr.rel (0) target = $region5
    $region4: #{tpu_custom_call.1} parent=1 // pred_region
      _
    $region5: #{tpu_custom_call.1} parent=1 // pred_fallthru
      _
    // Predicated region
    $region6: #{tpu_custom_call.1} parent=1 // pred_check
      _
    $region7: #{tpu_custom_call.1} parent=1 // pred_check_branch
      %17 = sbr.rel (0) target = $region9
    $region8: #{tpu_custom_call.1} parent=1 // pred_region
      _
    $region9: #{tpu_custom_call.1} parent=1 // pred_fallthru
      _
    // Predicated region
    $region10: #{tpu_custom_call.1} parent=1 // pred_check
      _
    $region11: #{tpu_custom_call.1} parent=1 // pred_check_branch
      %19 = sbr.rel (0) target = $region13
    $region12: #{tpu_custom_call.1} parent=1 // pred_region
      _
    $region13: #{tpu_custom_call.1} parent=1 // pred_fallthru
      _
    // Predicated region
    $region14: #{tpu_custom_call.1} parent=1 // pred_check
      _
    $region15: #{tpu_custom_call.1} parent=1 // pred_check_branch
      %21 = sbr.rel (0) target = $region17
    $region16: #{tpu_custom_call.1} parent=1 // pred_region
      %23 = vsyncadd [#allocation3], 0
      %s24 = sshll.u32 %s3, 4
      %s25 = int_to_ptr.hbm [resolvable:$true] %s24
      %s26 = sshll.u32 [#allocation2], 4
      %s27 = int_to_ptr.vmem [resolvable:$true] %s26
      %32 = dma.hbm_to_vmem [thread:$0]  %s25, 768, %s27, [#allocation3], 64, 64, 4
    $region17: #{tpu_custom_call.1} parent=1 // pred_fallthru
      _
    // Predicated region
    $region18: #{tpu_custom_call.1} parent=1 // pred_check
      _
    $region19: #{tpu_custom_call.1} parent=1 // pred_check_branch
      %34 = sbr.rel (0) target = $region21
    $region20: #{tpu_custom_call.1} parent=1 // pred_region
      _
    $region21: #{tpu_custom_call.1} parent=1 // pred_fallthru
      _
    // Predicated region
    $region22: #{tpu_custom_call.1} parent=1 // pred_check
      _
    $region23: #{tpu_custom_call.1} parent=1 // pred_check_branch
      %36 = sbr.rel (0) target = $region25
    $region24: #{tpu_custom_call.1} parent=1 // pred_region
      _
    $region25: #{tpu_custom_call.1} parent=1 // pred_fallthru
      _
    // Predicated region
    $region26: #{tpu_custom_call.1} parent=1 // pred_check
      _
    $region27: #{tpu_custom_call.1} parent=1 // pred_check_branch
      %38 = sbr.rel (0) target = $region29
    $region28: #{tpu_custom_call.1} parent=1 // pred_region
      _
    $region29: #{tpu_custom_call.1} parent=1 // pred_fallthru
      _
    // Predicated region
    $region30: #{tpu_custom_call.1} parent=1 // pred_check
      _
    $region31: #{tpu_custom_call.1} parent=1 // pred_check_branch
      %40 = sbr.rel (0) target = $region33
    $region32: #{tpu_custom_call.1} parent=1 // pred_region
      %42 = dma.done [#allocation3], 768
    $region33: #{tpu_custom_call.1} parent=1 // pred_fallthru
      _
    %v44 = vld [vmem:[%s0] sm:$0xf]
    %v45 = vld [vmem:[%s0 + $0x4] sm:$0xf]
    %v46 = vld [vmem:[%s0 + $0x8] sm:$0xf]
    %v47 = vld [vmem:[%s0 + $0xc] sm:$0xf]
    %v48 = vunpack.c.l.bf16 %v44
    %v49 = vunpack.c.l.bf16 %v45
    %v50 = vunpack.c.l.bf16 %v46
    %v51 = vunpack.c.l.bf16 %v47
    %v52 = vlaneseq
    %v53 = vand.u32 %v52, 127
    %vm54 = vcmp.lt.s32.totalorder %v53, 0
    %v55 = vsub.s32 0, %v53
    %v56 = vsel %vm54, %v55, %v53
    %v57 = vshrl.u32 %v56, 4
    %v58 = vand.u32 %v56, 15
    %v59 = vsub.s32 0, %v58
    %v60 = vsel %vm54, %v59, %v58
    %vm61 = vcmp.ne.s32.totalorder %v60, 0
    %vm62 = vcmp.lt.s32.totalorder %v60, 0
    %vm63 = vmand %vm62, %vm61
    %v64 = vadd.s32 %v60, 16
    %v65 = vsel %vm63, %v64, %v60
    %vm66 = vcmp.ne.s32.totalorder %v65, 0
    %vm67 = vcmp.ne.s32.totalorder %v65, 15
    %68 = vrot.lane.b32.xlu0 %v48, 1
    %v69 = vpop.permute.xlu0 %68
    %70 = vrot.lane.b32.xlu0 %v49, 1
    %v71 = vpop.permute.xlu0 %70
    %72 = vrot.lane.b32.xlu0 %v50, 1
    %v73 = vpop.permute.xlu0 %72
    %74 = vrot.lane.b32.xlu0 %v51, 1
    %v75 = vpop.permute.xlu0 %74
    %v76 = vsel %vm66, %v69, 0.0
    %v77 = vsel %vm66, %v71, 0.0
    %v78 = vsel %vm66, %v73, 0.0
    %v79 = vsel %vm66, %v75, 0.0
    %80 = vrot.lane.b32.xlu0 %v48, 127
    %v81 = vpop.permute.xlu0 %80
    %82 = vrot.lane.b32.xlu0 %v49, 127
    %v83 = vpop.permute.xlu0 %82
    %84 = vrot.lane.b32.xlu0 %v50, 127
    %v85 = vpop.permute.xlu0 %84
    %86 = vrot.lane.b32.xlu0 %v51, 127
    %v87 = vpop.permute.xlu0 %86
    %v88 = vsel %vm67, %v81, 0.0
    %v89 = vsel %vm67, %v83, 0.0
    %v90 = vsel %vm67, %v85, 0.0
    %v91 = vsel %vm67, %v87, 0.0
    %s92 = scalar_lea.vmem %s1, 16
    %v93 = vld [vmem:[%s92] sm:$0xf]
    %v94 = vld [vmem:[%s92 + $0x4] sm:$0xf]
    %v95 = vld [vmem:[%s92 + $0x8] sm:$0xf]
    %v96 = vld [vmem:[%s92 + $0xc] sm:$0xf]
    %v97 = vld [vmem:[%s1] sm:$0xf]
    %v98 = vld [vmem:[%s1 + $0x4] sm:$0xf]
    %v99 = vld [vmem:[%s1 + $0x8] sm:$0xf]
    %v100 = vld [vmem:[%s1 + $0xc] sm:$0xf]
    %v101 = vpack.c.bf16 %v77, %v76
    %v102 = vpack.c.bf16 %v79, %v78
    %v107 = vunpack.c.l.b16 %v97
    %v108 = vunpack.c.l.b16 %v98
    %v109 = vunpack.c.l.b16 %v99
    %v110 = vunpack.c.l.b16 %v100
    %v111 = vpack.c.b16 %v108, %v107
    %v112 = vpack.c.b16 %v110, %v109
    %vm113 = vcmask 261120
    %v115 = vsel %vm113, %v111, 0
    %v118 = vsel %vm113, %v112, 0
    %120 = vmatpush.bf16.msra.mxu0 0
    %121 = vmatpush.bf16.msra.mxu0 0
    %122 = vmatpush.bf16.msra.mxu0 0
    %123 = vmatpush.bf16.msra.mxu0 0
    %124 = vmatpush.bf16.msra.mxu0 0
    %125 = vmatpush.bf16.msra.mxu0 0
    %126 = vmatpush.bf16.msra.mxu0 %v102
    %127 = vmatpush.bf16.msra.mxu0 %v101
    %128 = vmatmul.bf16.gmra.mxu0 %v115
    %v129 = vpop.f32.mrf.mxu0
    %v130 = vadd.f32 0.0, %v129
    %v131 = vpop.f32.mrf.mxu0
    %v132 = vadd.f32 0.0, %v131
    %133 = vmatmul.bf16.gmra.mxu0 %v118
    %v134 = vpop.f32.mrf.mxu0
    %v135 = vadd.f32 0.0, %v134
    %v136 = vpop.f32.mrf.mxu0
    %v137 = vadd.f32 0.0, %v136
    %138 = vdwg.mxu0
    %v143 = vunpack.c.l.b16 %v93
    %v144 = vunpack.c.l.b16 %v94
    %v145 = vunpack.c.l.b16 %v95
    %v146 = vunpack.c.l.b16 %v96
    %v147 = vpack.c.b16 %v144, %v143
    %v148 = vpack.c.b16 %v146, %v145
    %v153 = vunpack.c.l.b16 %v44
    %v154 = vunpack.c.l.b16 %v45
    %v155 = vunpack.c.l.b16 %v46
    %v156 = vunpack.c.l.b16 %v47
    %v157 = vpack.c.b16 %v154, %v153
    %v158 = vpack.c.b16 %v156, %v155
    %v162 = vsel %vm113, %v147, 0
    %v165 = vsel %vm113, %v148, 0
    %167 = vmatpush.bf16.msra.mxu0 0
    %168 = vmatpush.bf16.msra.mxu0 0
    %169 = vmatpush.bf16.msra.mxu0 0
    %170 = vmatpush.bf16.msra.mxu0 0
    %171 = vmatpush.bf16.msra.mxu0 0
    %172 = vmatpush.bf16.msra.mxu0 0
    %173 = vmatpush.bf16.msra.mxu0 %v158
    %174 = vmatpush.bf16.msra.mxu0 %v157
    %175 = vmatmul.bf16.gmra.mxu0 %v162
    %v176 = vpop.f32.mrf.mxu0
    %v177 = vadd.f32 %v130, %v176
    %v178 = vpop.f32.mrf.mxu0
    %v179 = vadd.f32 %v132, %v178
    %180 = vmatmul.bf16.gmra.mxu0 %v165
    %v181 = vpop.f32.mrf.mxu0
    %v182 = vadd.f32 %v135, %v181
    %v183 = vpop.f32.mrf.mxu0
    %v184 = vadd.f32 %v137, %v183
    %185 = vdwg.mxu0
    %s186 = scalar_lea.vmem %s1, 32
    %v187 = vld [vmem:[%s186] sm:$0xf]
    %v188 = vld [vmem:[%s186 + $0x4] sm:$0xf]
    %v189 = vld [vmem:[%s186 + $0x8] sm:$0xf]
    %v190 = vld [vmem:[%s186 + $0xc] sm:$0xf]
    %v191 = vpack.c.bf16 %v89, %v88
    %v192 = vpack.c.bf16 %v91, %v90
    %v197 = vunpack.c.l.b16 %v187
    %v198 = vunpack.c.l.b16 %v188
    %v199 = vunpack.c.l.b16 %v189
    %v200 = vunpack.c.l.b16 %v190
    %v201 = vpack.c.b16 %v198, %v197
    %v202 = vpack.c.b16 %v200, %v199
    %v204 = vsel %vm113, %v201, 0
    %v207 = vsel %vm113, %v202, 0
    %209 = vmatpush.bf16.msra.mxu0 0
    %210 = vmatpush.bf16.msra.mxu0 0
    %211 = vmatpush.bf16.msra.mxu0 0
    %212 = vmatpush.bf16.msra.mxu0 0
    %213 = vmatpush.bf16.msra.mxu0 0
    %214 = vmatpush.bf16.msra.mxu0 0
    %215 = vmatpush.bf16.msra.mxu0 %v192
    %216 = vmatpush.bf16.msra.mxu0 %v191
    %217 = vmatmul.bf16.gmra.mxu0 %v204
    %v218 = vpop.f32.mrf.mxu0
    %v219 = vadd.f32 0.0, %v218
    %v220 = vpop.f32.mrf.mxu0
    %v221 = vadd.f32 0.0, %v220
    %222 = vmatmul.bf16.gmra.mxu0 %v207
    %v223 = vpop.f32.mrf.mxu0
    %v224 = vadd.f32 0.0, %v223
    %v225 = vpop.f32.mrf.mxu0
    %v226 = vadd.f32 0.0, %v225
    %227 = vdwg.mxu0
    %v228 = vadd.f32 %v177, %v219
    %v229 = vadd.f32 %v179, %v221
    %v230 = vadd.f32 %v182, %v224
    %v231 = vadd.f32 %v184, %v226
    %v232 = vld [vmem:[%s2] sm:$0xff]
    %v233 = vld [vmem:[%s2 + $0x8] sm:$0xff]
    %v234 = vld [vmem:[%s2 + $0x10] sm:$0xff]
    %v235 = vld [vmem:[%s2 + $0x18] sm:$0xff]
    %237 = vset.pattern.permute.xlu0 0
    %238 = vperm.xlu0 %237, %v232
    %v239 = vpop.permute.xlu0 %238
    %242 = vset.pattern.permute.xlu0 0
    %243 = vperm.xlu0 %242, %v233
    %v244 = vpop.permute.xlu0 %243
    %247 = vset.pattern.permute.xlu0 0
    %248 = vperm.xlu0 %247, %v234
    %v249 = vpop.permute.xlu0 %248
    %252 = vset.pattern.permute.xlu0 0
    %253 = vperm.xlu0 %252, %v235
    %v254 = vpop.permute.xlu0 %253
    %v256 = vadd.f32 %v228, %v239
    %v257 = vadd.f32 %v229, %v244
    %v258 = vadd.f32 %v230, %v249
    %v259 = vadd.f32 %v231, %v254
    %v260 = vmax.f32 %v256, 0.0
    %v261 = vmax.f32 %v257, 0.0
    %v262 = vmax.f32 %v258, 0.0
    %v263 = vmax.f32 %v259, 0.0
    %v264 = vpack.c.bf16 %v261, %v260
    %v265 = vpack.c.bf16 %v263, %v262
    %266 = vrot.lane.b32.xlu0 %v260, 1
    %v267 = vpop.permute.xlu0 %266
    %268 = vrot.lane.b32.xlu0 %v261, 1
    %v269 = vpop.permute.xlu0 %268
    %270 = vrot.lane.b32.xlu0 %v262, 1
    %v271 = vpop.permute.xlu0 %270
    %272 = vrot.lane.b32.xlu0 %v263, 1
    %v273 = vpop.permute.xlu0 %272
    %v274 = vsel %vm66, %v267, 0.0
    %v275 = vsel %vm66, %v269, 0.0
    %v276 = vsel %vm66, %v271, 0.0
    %v277 = vsel %vm66, %v273, 0.0
    %278 = vrot.lane.b32.xlu0 %v260, 127
    %v279 = vpop.permute.xlu0 %278
    %280 = vrot.lane.b32.xlu0 %v261, 127
    %v281 = vpop.permute.xlu0 %280
    %282 = vrot.lane.b32.xlu0 %v262, 127
    %v283 = vpop.permute.xlu0 %282
    %284 = vrot.lane.b32.xlu0 %v263, 127
    %v285 = vpop.permute.xlu0 %284
    %v286 = vsel %vm67, %v279, 0.0
    %v287 = vsel %vm67, %v281, 0.0
    %v288 = vsel %vm67, %v283, 0.0
    %v289 = vsel %vm67, %v285, 0.0
    %s290 = scalar_lea.vmem [#allocation2], 16
    %v291 = vld [vmem:[%s290] sm:$0xf]
    %v292 = vld [vmem:[%s290 + $0x4] sm:$0xf]
    %v293 = vld [vmem:[%s290 + $0x8] sm:$0xf]
    %v294 = vld [vmem:[%s290 + $0xc] sm:$0xf]
    %v295 = vld [vmem:[#allocation2] sm:$0xf]
    %v296 = vld [vmem:[#allocation2 + $0x4] sm:$0xf]
    %v297 = vld [vmem:[#allocation2 + $0x8] sm:$0xf]
    %v298 = vld [vmem:[#allocation2 + $0xc] sm:$0xf]
    %v299 = vpack.c.bf16 %v275, %v274
    %v300 = vpack.c.bf16 %v277, %v276
    %v305 = vunpack.c.l.b16 %v295
    %v306 = vunpack.c.l.b16 %v296
    %v307 = vunpack.c.l.b16 %v297
    %v308 = vunpack.c.l.b16 %v298
    %v309 = vpack.c.b16 %v306, %v305
    %v310 = vpack.c.b16 %v308, %v307
    %v312 = vsel %vm113, %v309, 0
    %v315 = vsel %vm113, %v310, 0
    %317 = vmatpush.bf16.msra.mxu0 0
    %318 = vmatpush.bf16.msra.mxu0 0
    %319 = vmatpush.bf16.msra.mxu0 0
    %320 = vmatpush.bf16.msra.mxu0 0
    %321 = vmatpush.bf16.msra.mxu0 0
    %322 = vmatpush.bf16.msra.mxu0 0
    %323 = vmatpush.bf16.msra.mxu0 %v300
    %324 = vmatpush.bf16.msra.mxu0 %v299
    %325 = vmatmul.bf16.gmra.mxu0 %v312
    %v326 = vpop.f32.mrf.mxu0
    %v327 = vadd.f32 0.0, %v326
    %v328 = vpop.f32.mrf.mxu0
    %v329 = vadd.f32 0.0, %v328
    %330 = vmatmul.bf16.gmra.mxu0 %v315
    %v331 = vpop.f32.mrf.mxu0
    %v332 = vadd.f32 0.0, %v331
    %v333 = vpop.f32.mrf.mxu0
    %v334 = vadd.f32 0.0, %v333
    %335 = vdwg.mxu0
    %v340 = vunpack.c.l.b16 %v291
    %v341 = vunpack.c.l.b16 %v292
    %v342 = vunpack.c.l.b16 %v293
    %v343 = vunpack.c.l.b16 %v294
    %v344 = vpack.c.b16 %v341, %v340
    %v345 = vpack.c.b16 %v343, %v342
    %v347 = vsel %vm113, %v344, 0
    %v350 = vsel %vm113, %v345, 0
    %352 = vmatpush.bf16.msra.mxu0 0
    %353 = vmatpush.bf16.msra.mxu0 0
    %354 = vmatpush.bf16.msra.mxu0 0
    %355 = vmatpush.bf16.msra.mxu0 0
    %356 = vmatpush.bf16.msra.mxu0 0
    %357 = vmatpush.bf16.msra.mxu0 0
    %358 = vmatpush.bf16.msra.mxu0 %v265
    %359 = vmatpush.bf16.msra.mxu0 %v264
    %360 = vmatmul.bf16.gmra.mxu0 %v347
    %v361 = vpop.f32.mrf.mxu0
    %v362 = vadd.f32 %v327, %v361
    %v363 = vpop.f32.mrf.mxu0
    %v364 = vadd.f32 %v329, %v363
    %365 = vmatmul.bf16.gmra.mxu0 %v350
    %v366 = vpop.f32.mrf.mxu0
    %v367 = vadd.f32 %v332, %v366
    %v368 = vpop.f32.mrf.mxu0
    %v369 = vadd.f32 %v334, %v368
    %370 = vdwg.mxu0
    %s371 = scalar_lea.vmem [#allocation2], 32
    %v372 = vld [vmem:[%s371] sm:$0xf]
    %v373 = vld [vmem:[%s371 + $0x4] sm:$0xf]
    %v374 = vld [vmem:[%s371 + $0x8] sm:$0xf]
    %v375 = vld [vmem:[%s371 + $0xc] sm:$0xf]
    %v376 = vpack.c.bf16 %v287, %v286
    %v377 = vpack.c.bf16 %v289, %v288
    %v382 = vunpack.c.l.b16 %v372
    %v383 = vunpack.c.l.b16 %v373
    %v384 = vunpack.c.l.b16 %v374
    %v385 = vunpack.c.l.b16 %v375
    %v386 = vpack.c.b16 %v383, %v382
    %v387 = vpack.c.b16 %v385, %v384
    %v389 = vsel %vm113, %v386, 0
    %v392 = vsel %vm113, %v387, 0
    %394 = vmatpush.bf16.msra.mxu0 0
    %395 = vmatpush.bf16.msra.mxu0 0
    %396 = vmatpush.bf16.msra.mxu0 0
    %397 = vmatpush.bf16.msra.mxu0 0
    %398 = vmatpush.bf16.msra.mxu0 0
    %399 = vmatpush.bf16.msra.mxu0 0
    %400 = vmatpush.bf16.msra.mxu0 %v377
    %401 = vmatpush.bf16.msra.mxu0 %v376
    %402 = vmatmul.bf16.gmra.mxu0 %v389
    %v403 = vpop.f32.mrf.mxu0
    %v404 = vadd.f32 0.0, %v403
    %v405 = vpop.f32.mrf.mxu0
    %v406 = vadd.f32 0.0, %v405
    %407 = vmatmul.bf16.gmra.mxu0 %v392
    %v408 = vpop.f32.mrf.mxu0
    %v409 = vadd.f32 0.0, %v408
    %v410 = vpop.f32.mrf.mxu0
    %v411 = vadd.f32 0.0, %v410
    %412 = vdwg.mxu0
    %v413 = vadd.f32 %v362, %v404
    %v414 = vadd.f32 %v364, %v406
    %v415 = vadd.f32 %v367, %v409
    %v416 = vadd.f32 %v369, %v411
    %v417 = vld [vmem:[%s4] sm:$0xff]
    %v418 = vld [vmem:[%s4 + $0x8] sm:$0xff]
    %v419 = vld [vmem:[%s4 + $0x10] sm:$0xff]
    %v420 = vld [vmem:[%s4 + $0x18] sm:$0xff]
    %422 = vset.pattern.permute.xlu0 0
    %423 = vperm.xlu0 %422, %v417
    %v424 = vpop.permute.xlu0 %423
    %427 = vset.pattern.permute.xlu0 0
    %428 = vperm.xlu0 %427, %v418
    %v429 = vpop.permute.xlu0 %428
    %432 = vset.pattern.permute.xlu0 0
    %433 = vperm.xlu0 %432, %v419
    %v434 = vpop.permute.xlu0 %433
    %437 = vset.pattern.permute.xlu0 0
    %438 = vperm.xlu0 %437, %v420
    %v439 = vpop.permute.xlu0 %438
    %v441 = vadd.f32 %v413, %v424
    %v442 = vadd.f32 %v414, %v429
    %v443 = vadd.f32 %v415, %v434
    %v444 = vadd.f32 %v416, %v439
    %v445 = vld [vmem:[%s5] sm:$0x1]
    %v446 = vpack.c.bf16 %v442, %v441
    %v447 = vpack.c.bf16 %v444, %v443
    %v449 = vsel %vm113, %v445, 0
    %451 = vmatpush.bf16.msra.mxu0 0
    %452 = vmatpush.bf16.msra.mxu0 0
    %453 = vmatpush.bf16.msra.mxu0 0
    %454 = vmatpush.bf16.msra.mxu0 0
    %455 = vmatpush.bf16.msra.mxu0 0
    %456 = vmatpush.bf16.msra.mxu0 0
    %457 = vmatpush.bf16.msra.mxu0 %v447
    %458 = vmatpush.bf16.msra.mxu0 %v446
    %459 = vmatmul.bf16.gmra.mxu0 %v449
    %v460 = vpop.f32.mrf.mxu0
    %v461 = vadd.f32 0.0, %v460
    %v462 = vpop.f32.mrf.mxu0
    %463 = vdwg.mxu0
    %464 = vrot.lane.b32.xlu0 %v461, 127
    %v465 = vpop.permute.xlu0 %464
    %v466 = vadd.f32 %v461, %v465
    %467 = vrot.lane.b32.xlu0 %v466, 126
    %v468 = vpop.permute.xlu0 %467
    %v469 = vadd.f32 %v466, %v468
    %470 = vrot.lane.b32.xlu0 %v469, 124
    %v471 = vpop.permute.xlu0 %470
    %v472 = vadd.f32 %v469, %v471
    %473 = vrot.lane.b32.xlu0 %v472, 120
    %v474 = vpop.permute.xlu0 %473
    %v475 = vadd.f32 %v472, %v474
    %vm476 = vcmp.eq.s32.totalorder %v65, 0
    %v477 = vsel %vm476, %v475, 0.0
    %v478 = vmul.f32 %v477, 0.0625
    %479 = vrot.lane.b32.xlu0 %v478, 1
    %v480 = vpop.permute.xlu0 %479
    %v481 = vadd.f32 %v478, %v480
    %482 = vrot.lane.b32.xlu0 %v481, 2
    %v483 = vpop.permute.xlu0 %482
    %v484 = vadd.f32 %v481, %v483
    %485 = vrot.lane.b32.xlu0 %v484, 4
    %v486 = vpop.permute.xlu0 %485
    %v487 = vadd.f32 %v484, %v486
    %488 = vrot.lane.b32.xlu0 %v487, 8
    %v489 = vpop.permute.xlu0 %488
    %v490 = vadd.f32 %v487, %v489
    %v491 = vmax.f32 %v490, 0.0
    %v492 = vld [vmem:[%s6] sm:$0xf]
    %v493 = vld [vmem:[%s6 + $0x4] sm:$0xf]
    %v494 = vld [vmem:[%s6 + $0x8] sm:$0xf]
    %v495 = vld [vmem:[%s6 + $0xc] sm:$0xf]
    %v496 = vpack.c.bf16 %v491, %v491
    %v501 = vunpack.c.l.b16 %v492
    %v502 = vunpack.c.l.b16 %v493
    %v503 = vunpack.c.l.b16 %v494
    %v504 = vunpack.c.l.b16 %v495
    %v505 = vpack.c.b16 %v502, %v501
    %v506 = vpack.c.b16 %v504, %v503
    %vm507 = vcmask 15360
    %v509 = vsel %vm507, %v505, 0
    %v512 = vsel %vm507, %v506, 0
    %vm514 = vcmask 1040384
    %v516 = vsel %vm514, %v496, 0
    %518 = vmatpush.bf16.msra.mxu0 0
    %519 = vmatpush.bf16.msra.mxu0 0
    %520 = vmatpush.bf16.msra.mxu0 0
    %521 = vmatpush.bf16.msra.mxu0 0
    %522 = vmatpush.bf16.msra.mxu0 0
    %523 = vmatpush.bf16.msra.mxu0 0
    %524 = vmatpush.bf16.msra.mxu0 0
    %525 = vmatpush.bf16.msra.mxu0 %v516
    %526 = vmatmul.bf16.gmra.mxu0 %v509
    %v527 = vpop.f32.mrf.mxu0
    %v528 = vadd.f32 0.0, %v527
    %v529 = vpop.f32.mrf.mxu0
    %v530 = vadd.f32 0.0, %v529
    %531 = vmatmul.bf16.gmra.mxu0 %v512
    %v532 = vpop.f32.mrf.mxu0
    %v533 = vadd.f32 0.0, %v532
    %v534 = vpop.f32.mrf.mxu0
    %v535 = vadd.f32 0.0, %v534
    %536 = vdwg.mxu0
    %v537 = vxor.u32 %v528, 2147483648
    %v538 = vxor.u32 %v530, 2147483648
    %v539 = vxor.u32 %v533, 2147483648
    %v540 = vxor.u32 %v535, 2147483648
    %v541 = vmul.f32 %v537, 1.442695
    %v542 = vpow.pop %v541
    %v543 = vmul.f32 %v538, 1.442695
    %v544 = vpow.pop %v543
    %v545 = vmul.f32 %v539, 1.442695
    %v546 = vpow.pop %v545
    %v547 = vmul.f32 %v540, 1.442695
    %v548 = vpow.pop %v547
    %v549 = vadd.f32 %v542, 1.0
    %v550 = vadd.f32 %v544, 1.0
    %v551 = vadd.f32 %v546, 1.0
    %v552 = vadd.f32 %v548, 1.0
    %v553 = vrcp.pop %v549
    %v554 = vmul.f32 %v549, %v553
    %v555 = vsub.f32 1.0, %v554
    %v556 = vmul.f32 %v553, %v555
    %v557 = vadd.f32 %v553, %v556
    %vm558 = vweird.f32 %v549
    %vm559 = vweird.f32 %v553
    %vm560 = vmor %vm558, %vm559
    %v561 = vsel %vm560, %v553, %v557
    %v562 = vand.u32 2147483647, %v549
    %vm563 = vcmp.eq.f32.partialorder %v562, 8.507059e+37
    %v564 = vand.u32 %v549, 2147483648
    %v565 = vor.u32 1.1754944e-38, %v564
    %v566 = vsel %vm563, %v565, %v561
    %v567 = vmul.f32 1.0, %v566
    %v568 = vrcp.pop %v550
    %v569 = vmul.f32 %v550, %v568
    %v570 = vsub.f32 1.0, %v569
    %v571 = vmul.f32 %v568, %v570
    %v572 = vadd.f32 %v568, %v571
    %vm573 = vweird.f32 %v550
    %vm574 = vweird.f32 %v568
    %vm575 = vmor %vm573, %vm574
    %v576 = vsel %vm575, %v568, %v572
    %v577 = vand.u32 2147483647, %v550
    %vm578 = vcmp.eq.f32.partialorder %v577, 8.507059e+37
    %v579 = vand.u32 %v550, 2147483648
    %v580 = vor.u32 1.1754944e-38, %v579
    %v581 = vsel %vm578, %v580, %v576
    %v582 = vmul.f32 1.0, %v581
    %v583 = vrcp.pop %v551
    %v584 = vmul.f32 %v551, %v583
    %v585 = vsub.f32 1.0, %v584
    %v586 = vmul.f32 %v583, %v585
    %v587 = vadd.f32 %v583, %v586
    %vm588 = vweird.f32 %v551
    %vm589 = vweird.f32 %v583
    %vm590 = vmor %vm588, %vm589
    %v591 = vsel %vm590, %v583, %v587
    %v592 = vand.u32 2147483647, %v551
    %vm593 = vcmp.eq.f32.partialorder %v592, 8.507059e+37
    %v594 = vand.u32 %v551, 2147483648
    %v595 = vor.u32 1.1754944e-38, %v594
    %v596 = vsel %vm593, %v595, %v591
    %v597 = vmul.f32 1.0, %v596
    %v598 = vrcp.pop %v552
    %v599 = vmul.f32 %v552, %v598
    %v600 = vsub.f32 1.0, %v599
    %v601 = vmul.f32 %v598, %v600
    %v602 = vadd.f32 %v598, %v601
    %vm603 = vweird.f32 %v552
    %vm604 = vweird.f32 %v598
    %vm605 = vmor %vm603, %vm604
    %v606 = vsel %vm605, %v598, %v602
    %v607 = vand.u32 2147483647, %v552
    %vm608 = vcmp.eq.f32.partialorder %v607, 8.507059e+37
    %v609 = vand.u32 %v552, 2147483648
    %v610 = vor.u32 1.1754944e-38, %v609
    %v611 = vsel %vm608, %v610, %v606
    %v612 = vmul.f32 1.0, %v611
    %v613 = vmul.f32 %v441, %v567
    %v614 = vmul.f32 %v442, %v582
    %v615 = vmul.f32 %v443, %v597
    %v616 = vmul.f32 %v444, %v612
    %v617 = vadd.f32 %v613, %v48
    %v618 = vadd.f32 %v614, %v49
    %v619 = vadd.f32 %v615, %v50
    %v620 = vadd.f32 %v616, %v51
    %v621 = vmax.f32 %v617, 0.0
    %v622 = vmax.f32 %v618, 0.0
    %v623 = vmax.f32 %v619, 0.0
    %v624 = vmax.f32 %v620, 0.0
    %625 = vst [vmem:[#allocation5] sm:$0xff] %v621
    %626 = vst [vmem:[#allocation5 + $0x8] sm:$0xff] %v622
    %627 = vst [vmem:[#allocation5 + $0x10] sm:$0xff] %v623
    %628 = vst [vmem:[#allocation5 + $0x18] sm:$0xff] %v624
    // Predicated region
    $region34: #{tpu_custom_call.1} parent=1 // pred_check
      _
    $region35: #{tpu_custom_call.1} parent=1 // pred_check_branch
      %630 = sbr.rel (0) target = $region37
    $region36: #{tpu_custom_call.1} parent=1 // pred_region
      %632 = vsyncadd [#allocation4], 0
      %s633 = sshll.u32 [#allocation5], 4
      %s634 = int_to_ptr.vmem [resolvable:$true] %s633
      %s635 = sshll.u32 %s7, 4
      %s636 = int_to_ptr.hbm [resolvable:$true] %s635
      %641 = dma.vmem_to_hbm [thread:$0]  %s634, 512, %s636, [#allocation4], 128, 128, 8
    $region37: #{tpu_custom_call.1} parent=1 // pred_fallthru
      _
    // Predicated region
    $region38: #{tpu_custom_call.1} parent=1 // pred_check
      _
    $region39: #{tpu_custom_call.1} parent=1 // pred_check_branch
      %643 = sbr.rel (0) target = $region41
    $region40: #{tpu_custom_call.1} parent=1 // pred_region
      %645 = dma.done [#allocation4], 512
    $region41: #{tpu_custom_call.1} parent=1 // pred_fallthru
      _
    %646 = vsyncpa [#allocation3], 1
    %647 = vsyncpa [#allocation4], 1

</llo_original>
